<compile_context>
chip_gen: v6e
topology: v6e:2x2x1
jax: 0.10.0
libtpu: 0.0.40
codegen_flags: <defaults>
</compile_context>

<pallas_src>
import functools

import jax
import jax.numpy as jnp
from jax.experimental import pallas as pl
from jax.experimental.pallas import tpu as pltpu


# ----------------------- synthetic heterograph config -----------------------
NUM_NODES = {"author": 16, "field": 12, "paper": 24}
CANONICAL_RELS = [
    ("paper", "cites", "paper"),
    ("paper", "has_topic", "field"),
    ("field", "topic_of", "paper"),
    ("author", "writes", "paper"),
    ("paper", "written_by", "author"),
]
REL_NAMES = sorted({r[1] for r in CANONICAL_RELS})   # sorted etypes -> weight index
NUM_ETYPES = len(REL_NAMES)                          # WeightBasis "num_rels"
NUM_CANON = len(CANONICAL_RELS)                      # kernel relation axis

IN_FEATS, HIDDEN_FEATS, OUT_FEATS = 16, 32, 8
NUM_LAYERS = 2
NUM_BASES = 2                                        # < NUM_ETYPES -> WeightBasis path

LANE = 128   # lane-dense feature padding
TILE = 128   # dst/src node tile AND per-node-type row alignment.
             # At real graph sizes use 256/512 (fills the 256-wide MXU on
             # v6e/v7x, amortizes ~0.35us per-grid-step overhead); node-type
             # offsets must stay TILE-aligned for the block-sparse skip.


def _round_up(x, m):
    return (x + m - 1) // m * m


# Pack node types so each type occupies whole TILE-aligned row blocks: the
# hetero adjacency is then block-sparse on a TILE grid and the kernel can skip
# zero type-blocks exactly.  Padded regions are explicitly zero-filled
# (correctness relies on this; keep zero-fill if restructuring).
NODE_TYPES = sorted(NUM_NODES)
NODE_OFFSETS, NODE_PAD = {}, {}
_off = 0
for _nt in NODE_TYPES:
    NODE_OFFSETS[_nt] = _off
    NODE_PAD[_nt] = _round_up(NUM_NODES[_nt], TILE)
    _off += NODE_PAD[_nt]
N_PAD = _off
N_DST_TILES = N_PAD // TILE
MAX_SRC_TILES = max(NODE_PAD[s] // TILE for (s, _, _) in CANONICAL_RELS)


def _vmem_limit_bytes():
    """Per-generation VMEM budget: ~3/4 of capacity, capped at 100 MiB."""
    try:
        cap = int(pltpu.get_tpu_info().vmem_capacity_bytes)
    except Exception:
        cap = 64 * 1024 * 1024          # conservative (v7x-sized) fallback
    return min(cap * 3 // 4, 100 * 1024 * 1024)


def build_rel_meta():
    """Static per-relation tile metadata (scalar-prefetched into SMEM)."""
    so, ns, dl, dh = [], [], [], []
    for stype, _, dtype_ in CANONICAL_RELS:
        so.append(NODE_OFFSETS[stype] // TILE)        # first src tile
        ns.append(NODE_PAD[stype] // TILE)            # number of src tiles
        dl.append(NODE_OFFSETS[dtype_] // TILE)       # first dst tile
        dh.append(NODE_OFFSETS[dtype_] // TILE + NODE_PAD[dtype_] // TILE)
    as_i32 = lambda v: jnp.asarray(v, dtype=jnp.int32)
    return as_i32(so), as_i32(ns), as_i32(dl), as_i32(dh)


# --------------------- stage 1: XW_r = X @ W_r (per relation) ----------------
def _xw_kernel(so_ref, ns_ref, x_ref, w_ref, o_ref):
    r = pl.program_id(0)
    s = pl.program_id(1)

    @pl.when(s < ns_ref[r])      # only this relation's source-type tiles
    def _compute():
        o_ref[...] = jnp.dot(
            x_ref[...], w_ref[...], preferred_element_type=jnp.float32
        ).astype(o_ref.dtype)


def precompute_xw(x_pad, w_stack, so, ns):
    """[NUM_CANON, N_PAD, FO_PAD] bf16; only source-type rows of each relation
    are computed/written (other rows are never read by the aggregation stage)."""
    n_pad, fi_pad = x_pad.shape
    num_rels, _, fo_pad = w_stack.shape

    def src_block(r, s, so_ref, ns_ref):
        return so_ref[r] + jnp.minimum(s, ns_ref[r] - 1)   # clamp skipped steps

    x_map = lambda r, s, so_ref, ns_ref: (src_block(r, s, so_ref, ns_ref), 0)
    w_map = lambda r, s, so_ref, ns_ref: (r, 0, 0)
    o_map = lambda r, s, so_ref, ns_ref: (r, src_block(r, s, so_ref, ns_ref), 0)

    return pl.pallas_call(
        _xw_kernel,
        grid_spec=pltpu.PrefetchScalarGridSpec(
            num_scalar_prefetch=2,
            grid=(num_rels, MAX_SRC_TILES),
            in_specs=[
                pl.BlockSpec((TILE, fi_pad), x_map),
                pl.BlockSpec((None, fi_pad, fo_pad), w_map),
            ],
            out_specs=pl.BlockSpec((None, TILE, fo_pad), o_map),
        ),
        out_shape=jax.ShapeDtypeStruct((num_rels, n_pad, fo_pad), jnp.bfloat16),
        compiler_params=pltpu.CompilerParams(
            dimension_semantics=("parallel", "arbitrary"),
            vmem_limit_bytes=_vmem_limit_bytes(),
        ),
    )(so, ns, x_pad, w_stack)


# ------------- stage 2: Y[dst] = relu(sum_r A_r @ XW_r + bias) ---------------
def _agg_kernel(so_ref, ns_ref, dl_ref, dh_ref, a_ref, xw_ref, b_ref, o_ref,
                acc_ref, *, apply_relu):
    i = pl.program_id(0)   # dst tile
    r = pl.program_id(1)   # relation (reduction)
    s = pl.program_id(2)   # src tile (reduction)

    @pl.when((r == 0) & (s == 0))
    def _init():
        acc_ref[...] = jnp.zeros_like(acc_ref)

    # Skip (dst_tile, relation) pairs outside the relation's destination-type
    # range and src tiles beyond the relation's source-type extent.
    valid = (i >= dl_ref[r]) & (i < dh_ref[r]) & (s < ns_ref[r])

    @pl.when(valid)
    def _accumulate():
        acc_ref[...] += jnp.dot(
            a_ref[...], xw_ref[...], preferred_element_type=jnp.float32
        )

    @pl.when((r == pl.num_programs(1) - 1) & (s == pl.num_programs(2) - 1))
    def _finalize():
        y = acc_ref[...] + b_ref[...]          # bias (zeros-init) fused
        if apply_relu:
            y = jnp.maximum(y, 0.0)            # activation between layers
        o_ref[...] = y.astype(o_ref.dtype)


def rgcn_aggregate(a_stack, xw_stack, bias_pad, meta, *, apply_relu, out_dtype):
    so, ns, dl, dh = meta
    num_rels, n_pad, _ = a_stack.shape
    fo_pad = xw_stack.shape[2]

    def src_block(r, s, so_ref, ns_ref):
        return so_ref[r] + jnp.minimum(s, ns_ref[r] - 1)

    def dst_block(i, r, dl_ref, dh_ref):
        # clamp skipped dst tiles to an in-range block (valid data, no OOB DMA)
        return jnp.minimum(jnp.maximum(i, dl_ref[r]), dh_ref[r] - 1)

    def a_map(i, r, s, so_ref, ns_ref, dl_ref, dh_ref):
        return (r, dst_block(i, r, dl_ref, dh_ref), src_block(r, s, so_ref, ns_ref))

    def xw_map(i, r, s, so_ref, ns_ref, dl_ref, dh_ref):
        return (r, src_block(r, s, so_ref, ns_ref), 0)

    def b_map(i, r, s, so_ref, ns_ref, dl_ref, dh_ref):
        return (0, 0)

    def o_map(i, r, s, so_ref, ns_ref, dl_ref, dh_ref):
        return (i, 0)

    kern = functools.partial(_agg_kernel, apply_relu=apply_relu)
    return pl.pallas_call(
        kern,
        grid_spec=pltpu.PrefetchScalarGridSpec(
            num_scalar_prefetch=4,
            grid=(n_pad // TILE, num_rels, MAX_SRC_TILES),
            in_specs=[
                pl.BlockSpec((None, TILE, TILE), a_map),      # A_r dst x src tile
                pl.BlockSpec((None, TILE, fo_pad), xw_map),   # XW_r src tile
                pl.BlockSpec((1, fo_pad), b_map),             # bias
            ],
            out_specs=pl.BlockSpec((TILE, fo_pad), o_map),
            scratch_shapes=[pltpu.VMEM((TILE, fo_pad), jnp.float32)],
        ),
        out_shape=jax.ShapeDtypeStruct((n_pad, fo_pad), out_dtype),
        compiler_params=pltpu.CompilerParams(
            dimension_semantics=("parallel", "arbitrary", "arbitrary"),
            vmem_limit_bytes=_vmem_limit_bytes(),
        ),
    )(so, ns, dl, dh, a_stack, xw_stack, bias_pad)


# --------------------------- params / graph setup ----------------------------
def xavier_uniform(key, shape, gain):
    fan_in, fan_out = shape[-2], shape[-1]
    bound = gain * (6.0 / (fan_in + fan_out)) ** 0.5
    return jax.random.uniform(key, shape, jnp.float32, -bound, bound)


def init_params(key):
    gain = 2.0 ** 0.5  # nn.init.calculate_gain('relu')
    dims = (
        [(IN_FEATS, HIDDEN_FEATS)]
        + [(HIDDEN_FEATS, HIDDEN_FEATS)] * (NUM_LAYERS - 2)
        + [(HIDDEN_FEATS, OUT_FEATS)]
    )
    layers = []
    for fi, fo in dims:
        key, k1, k2 = jax.random.split(key, 3)
        layers.append({
            "basis": xavier_uniform(k1, (NUM_BASES, fi, fo), gain),
            "w_comp": xavier_uniform(k2, (NUM_ETYPES, NUM_BASES), gain),
            "bias": jnp.zeros((fo,), jnp.float32),  # nn.init.zeros_
            "fi": fi,
            "fo": fo,
        })
    return layers


def build_adjacency(key):
    adj = {}
    for stype, etype, dtype_ in CANONICAL_RELS:
        key, sub = jax.random.split(key)
        nd, ns = NUM_NODES[dtype_], NUM_NODES[stype]
        a = jax.random.bernoulli(sub, 0.3, (nd, ns)).astype(jnp.float32)
        deg = jnp.clip(a.sum(axis=1, keepdims=True), 1.0, None)  # norm='right'
        adj[etype] = a / deg
    return adj


def stack_adjacency(adj):
    """Embed each relation's A_norm into its (dst_type, src_type) TILE-aligned
    block of [NUM_CANON, N_PAD, N_PAD]; stored bf16 in HBM (review item)."""
    a_stack = jnp.zeros((NUM_CANON, N_PAD, N_PAD), jnp.float32)
    for k, (stype, etype, dtype_) in enumerate(CANONICAL_RELS):
        do, so = NODE_OFFSETS[dtype_], NODE_OFFSETS[stype]
        nd, ns = NUM_NODES[dtype_], NUM_NODES[stype]
        a_stack = a_stack.at[k, do:do + nd, so:so + ns].set(adj[etype])
    return a_stack.astype(jnp.bfloat16)


def stack_features(feats, f_in):
    fi_pad = _round_up(f_in, LANE)
    x = jnp.zeros((N_PAD, fi_pad), jnp.float32)
    for nt in NODE_TYPES:
        off = NODE_OFFSETS[nt]
        x = x.at[off:off + NUM_NODES[nt], :f_in].set(feats[nt])
    return x.astype(jnp.bfloat16)   # activations stream as bf16 (review item)


# --------------------------------- forward -----------------------------------
def entity_classify_forward_pallas(layers_params, a_stack, x_stacked, meta):
    """Fused Pallas forward on the stacked/padded node representation.

    Every node type in this schema is a destination of some relation, so one
    stacked array between layers matches the per-type dict exactly.
    """
    so, ns, _, _ = meta
    x = x_stacked  # input_dropout p=0 -> identity
    for li, lp in enumerate(layers_params):
        fi, fo = lp["fi"], lp["fo"]
        nb = lp["basis"].shape[0]
        # WeightBasis: W_e = sum_b w_comp[e, b] * basis[b]   (tiny; plain XLA)
        w_all = jnp.matmul(
            lp["w_comp"], lp["basis"].reshape(nb, fi * fo)
        ).reshape(NUM_ETYPES, fi, fo)
        fi_pad, fo_pad = _round_up(fi, LANE), _round_up(fo, LANE)
        assert x.shape[1] == fi_pad
        # per-canonical-relation weight stack, lane-dense padded, bf16 in HBM
        w_stack = jnp.zeros((NUM_CANON, fi_pad, fo_pad), jnp.float32)
        for k, (_, etype, _) in enumerate(CANONICAL_RELS):
            w_stack = w_stack.at[k, :fi, :fo].set(w_all[REL_NAMES.index(etype)])
        w_stack = w_stack.astype(jnp.bfloat16)
        bias_pad = jnp.zeros((1, fo_pad), jnp.float32).at[0, :fo].set(lp["bias"])

        apply_relu = li < NUM_LAYERS - 1
        out_dtype = jnp.bfloat16 if li < NUM_LAYERS - 1 else jnp.float32

        xw = precompute_xw(x, w_stack, so, ns)                  # stage 1
        x = rgcn_aggregate(a_stack, xw, bias_pad, meta,         # stage 2
                           apply_relu=apply_relu, out_dtype=out_dtype)
        # dropout p=0 -> identity
    return x


def entity_classify_forward_ref(layers_params, adj_norm, feats):
    """Pure-JAX f32 reference on unpadded per-node-type dicts."""
    x = dict(feats)
    for li, lp in enumerate(layers_params):
        fi, fo = lp["fi"], lp["fo"]
        nb = lp["basis"].shape[0]
        w_all = jnp.matmul(
            lp["w_comp"], lp["basis"].reshape(nb, fi * fo)
        ).reshape(NUM_ETYPES, fi, fo)
        dst_types = sorted({d for (_, _, d) in CANONICAL_RELS})
        out = {nt: jnp.zeros((NUM_NODES[nt], fo), jnp.float32) for nt in dst_types}
        for stype, etype, dtype_ in CANONICAL_RELS:
            w = w_all[REL_NAMES.index(etype)]
            out[dtype_] = out[dtype_] + (adj_norm[etype] @ x[stype]) @ w
        apply_relu = li < NUM_LAYERS - 1
        new_x = {}
        for nt, h in out.items():
            y = h + lp["bias"][None, :]
            new_x[nt] = jnp.maximum(y, 0.0) if apply_relu else y
        x = new_x
    return x


# ----------------------------------- main -------------------------------------
if __name__ == "__main__":
    key = jax.random.PRNGKey(0)
    kp, ka, kf = jax.random.split(key, 3)

    params = init_params(kp)
    adj = build_adjacency(ka)

    feats = {}
    for nt in NODE_TYPES:
        kf, sub = jax.random.split(kf)
        feats[nt] = jax.random.normal(sub, (NUM_NODES[nt], IN_FEATS), jnp.float32)

    a_stack = stack_adjacency(adj)          # bf16 [NUM_CANON, N_PAD, N_PAD]
    x0 = stack_features(feats, IN_FEATS)    # bf16 [N_PAD, 128]
    meta = build_rel_meta()                 # int32 scalar-prefetch arrays

    out_stacked = entity_classify_forward_pallas(params, a_stack, x0, meta)
    out_stacked = jax.block_until_ready(out_stacked)

    # unpack per destination node type (all node types are destinations here)
    out = {
        nt: out_stacked[NODE_OFFSETS[nt]:NODE_OFFSETS[nt] + NUM_NODES[nt], :OUT_FEATS]
        for nt in NODE_TYPES
    }

    # pure-JAX f32 reference check; bf16 operand storage -> relative tolerance
    ref = entity_classify_forward_ref(params, adj, feats)
    for nt in out:
        assert out[nt].shape == (NUM_NODES[nt], OUT_FEATS), out[nt].shape
        err = float(jnp.max(jnp.abs(out[nt] - ref[nt])))
        scale = max(float(jnp.max(jnp.abs(ref[nt]))), 1.0)
        assert err < 5e-2 * scale, f"mismatch for {nt}: abs_err={err}, scale={scale}"

    print("KERNEL_OK")
</pallas_src>

<mosaic_0001>
module attributes {stable_mosaic.version = 11 : i64} {
  func.func @_xw_kernel(%arg0: i32, %arg1: i32, %arg2: memref<5xi32, #tpu.memory_space<smem>>, %arg3: memref<5xi32, #tpu.memory_space<smem>>, %arg4: memref<128x128xbf16, #tpu.memory_space<vmem>>, %arg5: memref<1x128x128xbf16, #tpu.memory_space<vmem>>, %arg6: memref<1x128x128xbf16, #tpu.memory_space<vmem>>) attributes {dimension_semantics = [#tpu.dimension_semantics<parallel>, #tpu.dimension_semantics<arbitrary>], iteration_bounds = array<i64: 5, 1>, scalar_prefetch = 2 : i64, scratch_operands = 0 : i64, tpu.core_type = #tpu.core_type<tc>, window_params = [{transform_indices = @transform_0, window_bounds = array<i64: 128, 128>}, {transform_indices = @transform_1, window_bounds = array<i64: 1, 128, 128>}, {transform_indices = @transform_2, window_bounds = array<i64: 1, 128, 128>}]} {
    %0 = arith.index_cast %arg0 : i32 to index
    %1 = memref.load %arg3[%0] : memref<5xi32, #tpu.memory_space<smem>>
    %2 = arith.cmpi slt, %arg1, %1 : i32
    %3 = arith.extui %2 : i1 to i32
    %c0_i32 = arith.constant 0 : i32
    %4 = arith.cmpi ne, %3, %c0_i32 : i32
    scf.if %4 {
      %c0 = arith.constant 0 : index
      %c0_0 = arith.constant 0 : index
      %5 = vector.load %arg4[%c0, %c0_0] : memref<128x128xbf16, #tpu.memory_space<vmem>>, vector<128x128xbf16>
      %c0_1 = arith.constant 0 : index
      %c0_2 = arith.constant 0 : index
      %c0_3 = arith.constant 0 : index
      %6 = vector.load %arg5[%c0_1, %c0_2, %c0_3] : memref<1x128x128xbf16, #tpu.memory_space<vmem>>, vector<1x128x128xbf16>
      %7 = vector.shape_cast %6 : vector<1x128x128xbf16> to vector<128x128xbf16>
      %cst = arith.constant dense<0.000000e+00> : vector<128x128xf32>
      %8 = tpu.matmul %5, %7, %cst {dimension_numbers = #tpu.dot_dimension_numbers<[1], [0], [0], [1], [0, 0, 1, 1], [], []>} : vector<128x128xbf16>, vector<128x128xbf16>, vector<128x128xf32> -> vector<128x128xf32>
      %9 = arith.truncf %8 : vector<128x128xf32> to vector<128x128xbf16>
      %c0_4 = arith.constant 0 : index
      %c0_5 = arith.constant 0 : index
      %c0_6 = arith.constant 0 : index
      %10 = vector.load %arg6[%c0_4, %c0_5, %c0_6] : memref<1x128x128xbf16, #tpu.memory_space<vmem>>, vector<1x128x128xbf16>
      %11 = vector.shape_cast %10 : vector<1x128x128xbf16> to vector<128x128xbf16>
      %12 = vector.shape_cast %9 : vector<128x128xbf16> to vector<1x128x128xbf16>
      tpu.vector_store %arg6[%c0_4, %c0_5, %c0_6], %12 {strides = array<i32>} : memref<1x128x128xbf16, #tpu.memory_space<vmem>>, vector<1x128x128xbf16>,
    } else {
    }
    return
  }
  func.func @transform_0(%arg0: i32, %arg1: i32, %arg2: memref<5xi32, #tpu.memory_space<smem>>, %arg3: memref<5xi32, #tpu.memory_space<smem>>) -> (i32, i32) {
    %0 = arith.index_cast %arg0 : i32 to index
    %1 = memref.load %arg2[%0] : memref<5xi32, #tpu.memory_space<smem>>
    %2 = arith.index_cast %arg0 : i32 to index
    %3 = memref.load %arg3[%2] : memref<5xi32, #tpu.memory_space<smem>>
    %c1_i32 = arith.constant 1 : i32
    %4 = arith.subi %3, %c1_i32 : i32
    %5 = arith.minsi %arg1, %4 : i32
    %6 = arith.addi %1, %5 : i32
    %c0_i32 = arith.constant 0 : i32
    %c0_i32_0 = arith.constant 0 : i32
    return %6, %c0_i32 : i32, i32
  }
  func.func @transform_1(%arg0: i32, %arg1: i32, %arg2: memref<5xi32, #tpu.memory_space<smem>>, %arg3: memref<5xi32, #tpu.memory_space<smem>>) -> (i32, i32, i32) {
    %c0_i32 = arith.constant 0 : i32
    %c0_i32_0 = arith.constant 0 : i32
    %c0_i32_1 = arith.constant 0 : i32
    return %arg0, %c0_i32, %c0_i32_0 : i32, i32, i32
  }
  func.func @transform_2(%arg0: i32, %arg1: i32, %arg2: memref<5xi32, #tpu.memory_space<smem>>, %arg3: memref<5xi32, #tpu.memory_space<smem>>) -> (i32, i32, i32) {
    %0 = arith.index_cast %arg0 : i32 to index
    %1 = memref.load %arg2[%0] : memref<5xi32, #tpu.memory_space<smem>>
    %2 = arith.index_cast %arg0 : i32 to index
    %3 = memref.load %arg3[%2] : memref<5xi32, #tpu.memory_space<smem>>
    %c1_i32 = arith.constant 1 : i32
    %4 = arith.subi %3, %c1_i32 : i32
    %5 = arith.minsi %arg1, %4 : i32
    %6 = arith.addi %1, %5 : i32
    %c0_i32 = arith.constant 0 : i32
    %c0_i32_0 = arith.constant 0 : i32
    return %arg0, %6, %c0_i32 : i32, i32, i32
  }
}

</mosaic_0001>

<llo_original>
// kernel: tpu_custom_call.1
$region0: #{tpu_custom_call.1}
  #allocation0 [shape = 'u32[]', space=smem, size = 0x4, offset = 0x4, fixed_abs, tag = 'smem constant byte address 0x4 - core index']
  #allocation1 [shape = 'u32[144,128]{1,0:T(1,128)}', space=vmem, size = 0x12000, scoped, tag = 'internal scratch']
  #allocation2 [shape = 's32[1]{0}', space=sflag, size = 0x4, scoped, tag = 'scoped memory for tpu_custom_call.1']
  #allocation3 [shape = 'u8[512]{0}', space=smem, size = 0x200, scoped, tag = 'prefetched SMEM operand 0']
  #allocation4 [shape = 'u8[512]{0}', space=smem, size = 0x200, scoped, tag = 'prefetched SMEM operand 1']
  %s0 = inlined_call_operand.hbm [shape: s32[5], index: 0, kind: input, shape index: {}]
  %s1 = inlined_call_operand.vmem [shape: s32[5], index: 1, kind: input, shape index: {}]
  %s2 = inlined_call_operand.hbm [shape: bf16[384,128], index: 2, kind: input, shape index: {}]
  %s3 = inlined_call_operand.hbm [shape: bf16[5,128,128], index: 3, kind: input, shape index: {}]
  %s4 = inlined_call_operand.hbm [shape: bf16[5,384,128], index: 4, kind: output, shape index: {}]
  %s5 = sld [smem:[#allocation0]]
  $region53: #{tpu_custom_call.1} parent=0
    _
  %s7 = ssub.s32 1, %s5
  %s8 = scalar_select 0, %s7, %s5
  %10 = dma.hbm_to_smem %s0, 16, [#allocation3], [#allocation2]
  %s11 = sshll.u32 %s1, 4
  %s12 = int_to_ptr.vmem [resolvable:$true] %s11
  %14 = dma.vmem_to_smem %s12, 16, [#allocation4], [#allocation2]
  %15 = dma.done [#allocation2], 32
  %16 = sfence
  $region1: #{tpu_custom_call.1} parent=0
    #allocation5 [shape = 'u8[65536]{0}', space=vmem, size = 0x10000, scoped, tag = 'input window, operand 2']
    #allocation6 [shape = 's32[2]{0}', space=sflag, size = 0x8, scoped, tag = 'scoped memory for tpu_custom_call.1']
    #allocation7 [shape = 's32[2]{0}', space=sflag, size = 0x8, scoped, tag = 'scoped memory for tpu_custom_call.1']
    #allocation8 [shape = 'u8[65536]{0}', space=vmem, size = 0x10000, scoped, tag = 'input window, operand 3']
    #allocation9 [shape = 's32[2]{0}', space=sflag, size = 0x8, scoped, tag = 'scoped memory for tpu_custom_call.1']
    #allocation10 [shape = 'u8[65536]{0}', space=vmem, size = 0x10000, scoped, tag = 'output window, operand 0']
    %17 = vsyncpa [#allocation6], 0
    %s18 = scalar_lea.sflag [#allocation6], 1
    %19 = vsyncpa %s18, 0
    %20 = vsyncpa [#allocation9], 0
    %s21 = scalar_lea.sflag [#allocation9], 1
    %22 = vsyncpa %s21, 0
    %23 = vsyncpa [#allocation7], 0
    %s24 = scalar_lea.sflag [#allocation7], 1
    %25 = vsyncpa %s24, 0
    loop: start=0, step=1, limit=7
    $region2: #{tpu_custom_call.1} parent=1 // loop_pre_header
      _
    $region3: #{tpu_custom_call.1} parent=1 // loop_header
      %s27 = sphi 0, %s31
      %p28 = scmp.ge.s32.totalorder %s27, 7
      %s34 = sphi 0, %s46
      %s35 = sphi 0, %s42
      %s36 = sphi 0, %s34
      %s37 = sphi 0, %s35
      %s38 = sphi 0, %s36
      %s39 = sphi 0, %s37
      %s61 = sphi 0, %s63
      %s64 = sphi 0, %s61
      %s65 = sphi 0, %s64
      %s81 = sphi 0, %s65
      %s87 = sphi 0, %s89
      %s90 = sphi 0, %s87
      %s91 = sphi 0, %s90
      %s107 = sphi 0, %s91
      %s127 = sphi 0, %s129
      %s130 = sphi 0, %s127
      %s131 = sphi 0, %s130
      %s147 = sphi 0, %s131
    $region4: #{tpu_custom_call.1} parent=1 // loop_header_branch
      %30 = sbr.rel (%p28) target = $region8
    $region5: #{tpu_custom_call.1} parent=1 // loop_body
      %s32 = ssub.s32 %s27, 1
      %s33 = ssub.s32 %s27, 2
      %s40 = sadd.s32 1, %s35
      %p41 = scmp.ge.s32.totalorder %s40, 1
      %s42 = scalar_select %p41, 0, %s40
      %s43 = sadd.s32 1, %s34
      %s44 = scalar_select %p41, %s43, %s34
      %p45 = scmp.ge.s32.totalorder %s44, 5
      %s46 = scalar_select %p45, 0, %s44
      %s47 = sld [smem:[#allocation3 + %s34]]
      %s48 = sld [smem:[#allocation4 + %s34]]
      %s49 = ssub.s32 %s48, 1
      %p50 = scmp.lt.s32.totalorder %s35, %s49
      %s51 = scalar_select %p50, %s35, %s49
      %s52 = sadd.s32 %s47, %s51
      %s53 = sld [smem:[#allocation3 + %s46]]
      %s54 = sld [smem:[#allocation4 + %s46]]
      %s55 = ssub.s32 %s54, 1
      %p56 = scmp.lt.s32.totalorder %s42, %s55
      %s57 = scalar_select %p56, %s42, %s55
      %s58 = sadd.s32 %s53, %s57
      %s59 = ssub.s32 %s52, %s58
      %p60 = scmp.eq.s32.totalorder %s59, 0
      %s62 = sadd.s32 %s61, 1
      %s63 = scalar_select %p60, %s61, %s62
      %p66 = pneg %p60
      %p67 = scmp.eq.s32.totalorder %s27, 4
      %p68 = por %p66, %p67
      %p69 = scmp.ne.s32.totalorder %s61, %s64
      %p70 = scmp.eq.s32.totalorder %s27, 0
      %p71 = por %p69, %p70
      %p72 = scmp.ne.s32.totalorder %s61, %s64
      %p73 = scmp.eq.s32.totalorder %s32, 4
      %p74 = por %p72, %p73
      %p75 = scmp.ne.s32.totalorder %s64, %s65
      %p76 = scmp.eq.s32.totalorder %s32, 0
      %p77 = por %p75, %p76
      %p78 = scmp.ne.s32.totalorder %s64, %s65
      %p79 = scmp.eq.s32.totalorder %s33, 4
      %p80 = por %p78, %p79
      %p82 = scmp.ne.s32.totalorder %s65, %s81
      %p83 = scmp.eq.s32.totalorder %s33, 0
      %p84 = por %p82, %p83
      %s85 = ssub.s32 %s34, %s46
      %p86 = scmp.eq.s32.totalorder %s85, 0
      %s88 = sadd.s32 %s87, 1
      %s89 = scalar_select %p86, %s87, %s88
      %p92 = pneg %p86
      %p93 = scmp.eq.s32.totalorder %s27, 4
      %p94 = por %p92, %p93
      %p95 = scmp.ne.s32.totalorder %s87, %s90
      %p96 = scmp.eq.s32.totalorder %s27, 0
      %p97 = por %p95, %p96
      %p98 = scmp.ne.s32.totalorder %s87, %s90
      %p99 = scmp.eq.s32.totalorder %s32, 4
      %p100 = por %p98, %p99
      %p101 = scmp.ne.s32.totalorder %s90, %s91
      %p102 = scmp.eq.s32.totalorder %s32, 0
      %p103 = por %p101, %p102
      %p104 = scmp.ne.s32.totalorder %s90, %s91
      %p105 = scmp.eq.s32.totalorder %s33, 4
      %p106 = por %p104, %p105
      %p108 = scmp.ne.s32.totalorder %s91, %s107
      %p109 = scmp.eq.s32.totalorder %s33, 0
      %p110 = por %p108, %p109
      %s111 = sld [smem:[#allocation3 + %s34]]
      %s112 = sld [smem:[#allocation4 + %s34]]
      %s113 = ssub.s32 %s112, 1
      %p114 = scmp.lt.s32.totalorder %s35, %s113
      %s115 = scalar_select %p114, %s35, %s113
      %s116 = sadd.s32 %s111, %s115
      %s117 = sld [smem:[#allocation3 + %s46]]
      %s118 = sld [smem:[#allocation4 + %s46]]
      %s119 = ssub.s32 %s118, 1
      %p120 = scmp.lt.s32.totalorder %s42, %s119
      %s121 = scalar_select %p120, %s42, %s119
      %s122 = sadd.s32 %s117, %s121
      %s123 = ssub.s32 %s34, %s46
      %s124 = ssub.s32 %s116, %s122
      %s125 = sor.u32 %s123, %s124
      %p126 = scmp.eq.s32.totalorder %s125, 0
      %s128 = sadd.s32 %s127, 1
      %s129 = scalar_select %p126, %s127, %s128
      %p132 = pneg %p126
      %p133 = scmp.eq.s32.totalorder %s27, 4
      %p134 = por %p132, %p133
      %p135 = scmp.ne.s32.totalorder %s127, %s130
      %p136 = scmp.eq.s32.totalorder %s27, 0
      %p137 = por %p135, %p136
      %p138 = scmp.ne.s32.totalorder %s127, %s130
      %p139 = scmp.eq.s32.totalorder %s32, 4
      %p140 = por %p138, %p139
      %p141 = scmp.ne.s32.totalorder %s130, %s131
      %p142 = scmp.eq.s32.totalorder %s32, 0
      %p143 = por %p141, %p142
      %p144 = scmp.ne.s32.totalorder %s130, %s131
      %p145 = scmp.eq.s32.totalorder %s33, 4
      %p146 = por %p144, %p145
      %p148 = scmp.ne.s32.totalorder %s131, %s147
      %p149 = scmp.eq.s32.totalorder %s33, 0
      %p150 = por %p148, %p149
      %p151 = scmp.le.s32.totalorder 1, %s27
      %p152 = scmp.lt.s32.totalorder %s27, 6
      %p153 = pnand %p151, %p152
      %p154 = pneg %p153
      // Predicated region
      $region9: #{tpu_custom_call.1} parent=5 // pred_check
        _
      $region10: #{tpu_custom_call.1} parent=5 // pred_check_branch
        %156 = sbr.rel (%p153) target = $region12
      $region11: #{tpu_custom_call.1} parent=5 // pred_region
        %s157 = ssub.s32 %s27, 1
      $region12: #{tpu_custom_call.1} parent=5 // pred_fallthru
        _
      %p158 = scmp.lt.s32.totalorder %s27, 5
      // Predicated region
      $region13: #{tpu_custom_call.1} parent=5 // pred_check
        %p159 = pneg %p158
      $region14: #{tpu_custom_call.1} parent=5 // pred_check_branch
        %161 = sbr.rel (%p159) target = $region16
      $region15: #{tpu_custom_call.1} parent=5 // pred_region
        // Predicated region
        $region17: #{tpu_custom_call.1} parent=15 // pred_check
          %p162 = pneg %p71
        $region18: #{tpu_custom_call.1} parent=15 // pred_check_branch
          %164 = sbr.rel (%p162) target = $region20
        $region19: #{tpu_custom_call.1} parent=15 // pred_region
          %s165 = sand.u32 %s61, 1
          %s166 = scalar_lea.sflag [#allocation6], %s165
          %s167 = sand.u32 %s61, 1
          %s168 = smul.addr %s167, 64
          %s169 = scalar_lea.vmem [#allocation5], %s168
          %s170 = sld [smem:[#allocation3 + %s34]]
          %s171 = sld [smem:[#allocation4 + %s34]]
          %s172 = ssub.s32 %s171, 1
          %p173 = scmp.lt.s32.totalorder %s35, %s172
          %s174 = scalar_select %p173, %s35, %s172
          %s175 = sadd.s32 %s170, %s174
          %s176 = smul.u32 16, %s175
          %s178 = ssub.s32 1024, 1024
          %179 = vsyncadd %s166, %s178
          %s180 = smul.addr %s176, 64
          %s181 = scalar_lea.hbm %s2, %s180
          %s182 = sshll.u32 %s169, 4
          %s183 = int_to_ptr.vmem [resolvable:$true] %s182
          %188 = dma.hbm_to_vmem [thread:$0]  %s181, 1024, %s183, %s166, 64, 64, 4
        $region20: #{tpu_custom_call.1} parent=15 // pred_fallthru
          _
        // Predicated region
        $region21: #{tpu_custom_call.1} parent=15 // pred_check
          %p189 = pneg %p97
        $region22: #{tpu_custom_call.1} parent=15 // pred_check_branch
          %191 = sbr.rel (%p189) target = $region24
        $region23: #{tpu_custom_call.1} parent=15 // pred_region
          %s192 = sand.u32 %s87, 1
          %s193 = scalar_lea.sflag [#allocation9], %s192
          %s194 = sand.u32 %s87, 1
          %s195 = smul.addr %s194, 64
          %s196 = scalar_lea.vmem [#allocation8], %s195
          %s198 = ssub.s32 1024, 1024
          %199 = vsyncadd %s193, %s198
          %s200 = smul.addr %s34, 16
          %s201 = smul.addr %s200, 64
          %s202 = scalar_lea.hbm %s3, %s201
          %s203 = sshll.u32 %s196, 4
          %s204 = int_to_ptr.vmem [resolvable:$true] %s203
          %209 = dma.hbm_to_vmem [thread:$0]  %s202, 1024, %s204, %s193, 64, 64, 4
        $region24: #{tpu_custom_call.1} parent=15 // pred_fallthru
          _
      $region16: #{tpu_custom_call.1} parent=5 // pred_fallthru
        _
      %p210 = scmp.le.s32.totalorder 1, %s27
      %p211 = scmp.lt.s32.totalorder %s27, 6
      %p212 = pnand %p210, %p211
      %p213 = pneg %p212
      // Predicated region
      $region25: #{tpu_custom_call.1} parent=5 // pred_check
        _
      $region26: #{tpu_custom_call.1} parent=5 // pred_check_branch
        %215 = sbr.rel (%p212) target = $region28
      $region27: #{tpu_custom_call.1} parent=5 // pred_region
        %s216 = ssub.s32 %s27, 1
        %s217 = sand.u32 %s64, 1
        %s218 = scalar_lea.sflag [#allocation6], %s217
        %s219 = sand.u32 %s64, 1
        %s220 = smul.addr %s219, 64
        %s221 = scalar_lea.vmem [#allocation5], %s220
        // Predicated region
        $region29: #{tpu_custom_call.1} parent=27 // pred_check
          %p222 = pneg %p77
        $region30: #{tpu_custom_call.1} parent=27 // pred_check_branch
          %224 = sbr.rel (%p222) target = $region32
        $region31: #{tpu_custom_call.1} parent=27 // pred_region
          %225 = dma.done %s218, 1024
        $region32: #{tpu_custom_call.1} parent=27 // pred_fallthru
          _
        %s226 = sand.u32 %s90, 1
        %s227 = scalar_lea.sflag [#allocation9], %s226
        %s228 = sand.u32 %s90, 1
        %s229 = smul.addr %s228, 64
        %s230 = scalar_lea.vmem [#allocation8], %s229
        // Predicated region
        $region33: #{tpu_custom_call.1} parent=27 // pred_check
          %p231 = pneg %p103
        $region34: #{tpu_custom_call.1} parent=27 // pred_check_branch
          %233 = sbr.rel (%p231) target = $region36
        $region35: #{tpu_custom_call.1} parent=27 // pred_region
          %234 = dma.done %s227, 1024
        $region36: #{tpu_custom_call.1} parent=27 // pred_fallthru
          _
        %s235 = sand.u32 %s64, 1
        %s236 = scalar_lea.sflag [#allocation6], %s235
        %s237 = sand.u32 %s64, 1
        %s238 = smul.addr %s237, 64
        %s239 = scalar_lea.vmem [#allocation5], %s238
        %p240 = pneg %p77
        %p241 = pneg %p74
        %s242 = sand.u32 %s90, 1
        %s243 = scalar_lea.sflag [#allocation9], %s242
        %s244 = sand.u32 %s90, 1
        %s245 = smul.addr %s244, 64
        %s246 = scalar_lea.vmem [#allocation8], %s245
        %p247 = pneg %p103
        %p248 = pneg %p100
        %p249 = pneg %p143
        %p250 = pneg %p140
        %s251 = sand.u32 %s130, 1
        %s252 = scalar_lea.sflag [#allocation7], %s251
        %s253 = sand.u32 %s130, 1
        %s254 = smul.addr %s253, 64
        %s255 = scalar_lea.vmem [#allocation10], %s254
        %s256 = sld [smem:[#allocation3 + %s36]]
        %s257 = sld [smem:[#allocation4 + %s36]]
        %s258 = ssub.s32 %s257, 1
        %p259 = scmp.lt.s32.totalorder %s37, %s258
        %s260 = scalar_select %p259, %s37, %s258
        %s261 = sadd.s32 %s256, %s260
        %s262 = smul.u32 16, %s261
        %s263 = sld [smem:[#allocation3 + %s36]]
        %s264 = sld [smem:[#allocation4 + %s36]]
        %s265 = ssub.s32 %s264, 1
        %p266 = scmp.lt.s32.totalorder %s37, %s265
        %s267 = scalar_select %p266, %s37, %s265
        %s268 = sadd.s32 %s263, %s267
        %s269 = smul.u32 16, %s268
        %s271 = sld [smem:[#allocation4 + %s36]]
        %p272 = scmp.lt.s32.totalorder %s37, %s271
        // Predicated region
        $region37: #{tpu_custom_call.1} parent=27 // pred_check
          %p273 = pneg %p272
        $region38: #{tpu_custom_call.1} parent=27 // pred_check_branch
          %275 = sbr.rel (%p273) target = $region40
        $region39: #{tpu_custom_call.1} parent=27 // pred_region
          %v276 = vld [vmem:[%s221] sm:$0xf]
          %v277 = vld [vmem:[%s221 + $0x4] sm:$0xf]
          %v278 = vld [vmem:[%s221 + $0x8] sm:$0xf]
          %v279 = vld [vmem:[%s221 + $0xc] sm:$0xf]
          %v280 = vld [vmem:[%s221 + $0x10] sm:$0xf]
          %v281 = vld [vmem:[%s221 + $0x14] sm:$0xf]
          %v282 = vld [vmem:[%s221 + $0x18] sm:$0xf]
          %v283 = vld [vmem:[%s221 + $0x1c] sm:$0xf]
          %v284 = vld [vmem:[%s221 + $0x20] sm:$0xf]
          %v285 = vld [vmem:[%s221 + $0x24] sm:$0xf]
          %v286 = vld [vmem:[%s221 + $0x28] sm:$0xf]
          %v287 = vld [vmem:[%s221 + $0x2c] sm:$0xf]
          %v288 = vld [vmem:[%s221 + $0x30] sm:$0xf]
          %v289 = vld [vmem:[%s221 + $0x34] sm:$0xf]
          %v290 = vld [vmem:[%s221 + $0x38] sm:$0xf]
          %v291 = vld [vmem:[%s221 + $0x3c] sm:$0xf]
          %v292 = vld [vmem:[%s230] sm:$0xf]
          %v293 = vld [vmem:[%s230 + $0x4] sm:$0xf]
          %v294 = vld [vmem:[%s230 + $0x8] sm:$0xf]
          %v295 = vld [vmem:[%s230 + $0xc] sm:$0xf]
          %v296 = vld [vmem:[%s230 + $0x10] sm:$0xf]
          %v297 = vld [vmem:[%s230 + $0x14] sm:$0xf]
          %v298 = vld [vmem:[%s230 + $0x18] sm:$0xf]
          %v299 = vld [vmem:[%s230 + $0x1c] sm:$0xf]
          %v300 = vld [vmem:[%s230 + $0x20] sm:$0xf]
          %v301 = vld [vmem:[%s230 + $0x24] sm:$0xf]
          %v302 = vld [vmem:[%s230 + $0x28] sm:$0xf]
          %v303 = vld [vmem:[%s230 + $0x2c] sm:$0xf]
          %v304 = vld [vmem:[%s230 + $0x30] sm:$0xf]
          %v305 = vld [vmem:[%s230 + $0x34] sm:$0xf]
          %v306 = vld [vmem:[%s230 + $0x38] sm:$0xf]
          %v307 = vld [vmem:[%s230 + $0x3c] sm:$0xf]
          %v324 = vunpack.c.l.b16 %v276
          %v325 = vunpack.c.l.b16 %v277
          %v326 = vunpack.c.l.b16 %v278
          %v327 = vunpack.c.l.b16 %v279
          %v328 = vunpack.c.l.b16 %v280
          %v329 = vunpack.c.l.b16 %v281
          %v330 = vunpack.c.l.b16 %v282
          %v331 = vunpack.c.l.b16 %v283
          %v332 = vunpack.c.l.b16 %v284
          %v333 = vunpack.c.l.b16 %v285
          %v334 = vunpack.c.l.b16 %v286
          %v335 = vunpack.c.l.b16 %v287
          %v336 = vunpack.c.l.b16 %v288
          %v337 = vunpack.c.l.b16 %v289
          %v338 = vunpack.c.l.b16 %v290
          %v339 = vunpack.c.l.b16 %v291
          %v340 = vpack.c.b16 %v325, %v324
          %v341 = vpack.c.b16 %v327, %v326
          %v342 = vpack.c.b16 %v329, %v328
          %v343 = vpack.c.b16 %v331, %v330
          %v344 = vpack.c.b16 %v333, %v332
          %v345 = vpack.c.b16 %v335, %v334
          %v346 = vpack.c.b16 %v337, %v336
          %v347 = vpack.c.b16 %v339, %v338
          %v372 = vunpack.c.l.b16 %v292
          %v373 = vunpack.c.l.b16 %v293
          %v374 = vunpack.c.l.b16 %v294
          %v375 = vunpack.c.l.b16 %v295
          %v376 = vunpack.c.l.b16 %v296
          %v377 = vunpack.c.l.b16 %v297
          %v378 = vunpack.c.l.b16 %v298
          %v379 = vunpack.c.l.b16 %v299
          %v380 = vunpack.c.l.b16 %v300
          %v381 = vunpack.c.l.b16 %v301
          %v382 = vunpack.c.l.b16 %v302
          %v383 = vunpack.c.l.b16 %v303
          %v384 = vunpack.c.l.b16 %v304
          %v385 = vunpack.c.l.b16 %v305
          %v386 = vunpack.c.l.b16 %v306
          %v387 = vunpack.c.l.b16 %v307
          %v388 = vpack.c.b16 %v373, %v372
          %v389 = vpack.c.b16 %v375, %v374
          %v390 = vpack.c.b16 %v377, %v376
          %v391 = vpack.c.b16 %v379, %v378
          %v392 = vpack.c.b16 %v381, %v380
          %v393 = vpack.c.b16 %v383, %v382
          %v394 = vpack.c.b16 %v385, %v384
          %v395 = vpack.c.b16 %v387, %v386
          %404 = vmatprep.subr.bf16.mxu0 0
          %405 = vmatpush1.bf16.msra.mxu0 %v395
          %406 = vmatprep.subr.bf16.mxu0 0
          %407 = vmatpush1.bf16.msra.mxu0 %v394
          %408 = vmatprep.subr.bf16.mxu0 0
          %409 = vmatpush1.bf16.msra.mxu0 %v393
          %410 = vmatprep.subr.bf16.mxu0 0
          %411 = vmatpush1.bf16.msra.mxu0 %v392
          %412 = vmatprep.subr.bf16.mxu0 0
          %413 = vmatpush1.bf16.msra.mxu0 %v391
          %414 = vmatprep.subr.bf16.mxu0 0
          %415 = vmatpush1.bf16.msra.mxu0 %v390
          %416 = vmatprep.subr.bf16.mxu0 0
          %417 = vmatpush1.bf16.msra.mxu0 %v389
          %418 = vmatprep.subr.bf16.mxu0 0
          %419 = vmatpush1.bf16.msra.mxu0 %v388
          %420 = vmatprep.subr.bf16.mxu0 0
          %421 = vmatpush2.bf16.msra.mxu0 0
          %422 = vmatprep.subr.bf16.mxu0 0
          %423 = vmatpush2.bf16.msra.mxu0 0
          %424 = vmatprep.subr.bf16.mxu0 0
          %425 = vmatpush2.bf16.msra.mxu0 0
          %426 = vmatprep.subr.bf16.mxu0 0
          %427 = vmatpush2.bf16.msra.mxu0 0
          %428 = vmatprep.subr.bf16.mxu0 0
          %429 = vmatpush2.bf16.msra.mxu0 0
          %430 = vmatprep.subr.bf16.mxu0 0
          %431 = vmatpush2.bf16.msra.mxu0 0
          %432 = vmatprep.subr.bf16.mxu0 0
          %433 = vmatpush2.bf16.msra.mxu0 0
          %434 = vmatprep.subr.bf16.mxu0 0
          %435 = vmatpush2.bf16.msra.mxu0 0
          %436 = vmatprep.mubr.bf16.mxu0 0
          %437 = vmatmul.mubr.bf16.gmra.mxu0 %v340
          %v438 = vpop.f32.mrf.mxu0
          %v439 = vadd.f32 0.0, %v438
          %v440 = vpop.f32.mrf.mxu0
          %v441 = vpop.f32.mrf.mxu0
          %v442 = vadd.f32 0.0, %v441
          %v443 = vpop.f32.mrf.mxu0
          %444 = vmatprep.mubr.bf16.mxu0 0
          %445 = vmatmul.mubr.bf16.gmra.mxu0 %v341
          %v446 = vpop.f32.mrf.mxu0
          %v447 = vadd.f32 0.0, %v446
          %v448 = vpop.f32.mrf.mxu0
          %v449 = vpop.f32.mrf.mxu0
          %v450 = vadd.f32 0.0, %v449
          %v451 = vpop.f32.mrf.mxu0
          %452 = vmatprep.mubr.bf16.mxu0 0
          %453 = vmatmul.mubr.bf16.gmra.mxu0 %v342
          %v454 = vpop.f32.mrf.mxu0
          %v455 = vadd.f32 0.0, %v454
          %v456 = vpop.f32.mrf.mxu0
          %v457 = vpop.f32.mrf.mxu0
          %v458 = vadd.f32 0.0, %v457
          %v459 = vpop.f32.mrf.mxu0
          %460 = vmatprep.mubr.bf16.mxu0 0
          %461 = vmatmul.mubr.bf16.gmra.mxu0 %v343
          %v462 = vpop.f32.mrf.mxu0
          %v463 = vadd.f32 0.0, %v462
          %v464 = vpop.f32.mrf.mxu0
          %v465 = vpop.f32.mrf.mxu0
          %v466 = vadd.f32 0.0, %v465
          %v467 = vpop.f32.mrf.mxu0
          %468 = vmatprep.mubr.bf16.mxu0 0
          %469 = vmatmul.mubr.bf16.gmra.mxu0 %v344
          %v470 = vpop.f32.mrf.mxu0
          %v471 = vadd.f32 0.0, %v470
          %v472 = vpop.f32.mrf.mxu0
          %v473 = vpop.f32.mrf.mxu0
          %v474 = vadd.f32 0.0, %v473
          %v475 = vpop.f32.mrf.mxu0
          %476 = vmatprep.mubr.bf16.mxu0 0
          %477 = vmatmul.mubr.bf16.gmra.mxu0 %v345
          %v478 = vpop.f32.mrf.mxu0
          %v479 = vadd.f32 0.0, %v478
          %v480 = vpop.f32.mrf.mxu0
          %v481 = vpop.f32.mrf.mxu0
          %v482 = vadd.f32 0.0, %v481
          %v483 = vpop.f32.mrf.mxu0
          %484 = vmatprep.mubr.bf16.mxu0 0
          %485 = vmatmul.mubr.bf16.gmra.mxu0 %v346
          %v486 = vpop.f32.mrf.mxu0
          %v487 = vadd.f32 0.0, %v486
          %v488 = vpop.f32.mrf.mxu0
          %v489 = vpop.f32.mrf.mxu0
          %v490 = vadd.f32 0.0, %v489
          %v491 = vpop.f32.mrf.mxu0
          %492 = vmatprep.mubr.bf16.mxu0 0
          %493 = vmatmul.mubr.bf16.gmra.mxu0 %v347
          %v494 = vpop.f32.mrf.mxu0
          %v495 = vadd.f32 0.0, %v494
          %v496 = vpop.f32.mrf.mxu0
          %v497 = vpop.f32.mrf.mxu0
          %v498 = vadd.f32 0.0, %v497
          %v499 = vpop.f32.mrf.mxu0
          %500 = vdwg.mxu0
          %v501 = vpack.c.bf16 %v442, %v439
          %v502 = vpack.c.bf16 %v450, %v447
          %v503 = vpack.c.bf16 %v458, %v455
          %v504 = vpack.c.bf16 %v466, %v463
          %v505 = vpack.c.bf16 %v474, %v471
          %v506 = vpack.c.bf16 %v482, %v479
          %v507 = vpack.c.bf16 %v490, %v487
          %v508 = vpack.c.bf16 %v498, %v495
          %v517 = vunpack.c.l.b16 %v501
          %v518 = vunpack.c.h.b16 %v501
          %v519 = vunpack.c.l.b16 %v502
          %v520 = vunpack.c.h.b16 %v502
          %v521 = vunpack.c.l.b16 %v503
          %v522 = vunpack.c.h.b16 %v503
          %v523 = vunpack.c.l.b16 %v504
          %v524 = vunpack.c.h.b16 %v504
          %v525 = vunpack.c.l.b16 %v505
          %v526 = vunpack.c.h.b16 %v505
          %v527 = vunpack.c.l.b16 %v506
          %v528 = vunpack.c.h.b16 %v506
          %v529 = vunpack.c.l.b16 %v507
          %v530 = vunpack.c.h.b16 %v507
          %v531 = vunpack.c.l.b16 %v508
          %v532 = vunpack.c.h.b16 %v508
          %v533 = vpack.c.b16 %v517, %v517
          %v534 = vpack.c.b16 %v518, %v518
          %v535 = vpack.c.b16 %v519, %v519
          %v536 = vpack.c.b16 %v520, %v520
          %v537 = vpack.c.b16 %v521, %v521
          %v538 = vpack.c.b16 %v522, %v522
          %v539 = vpack.c.b16 %v523, %v523
          %v540 = vpack.c.b16 %v524, %v524
          %v541 = vpack.c.b16 %v525, %v525
          %v542 = vpack.c.b16 %v526, %v526
          %v543 = vpack.c.b16 %v527, %v527
          %v544 = vpack.c.b16 %v528, %v528
          %v545 = vpack.c.b16 %v529, %v529
          %v546 = vpack.c.b16 %v530, %v530
          %v547 = vpack.c.b16 %v531, %v531
          %v548 = vpack.c.b16 %v532, %v532
          %565 = vst [vmem:[%s255] sm:$0xf] %v533
          %566 = vst [vmem:[%s255 + $0x4] sm:$0xf] %v534
          %567 = vst [vmem:[%s255 + $0x8] sm:$0xf] %v535
          %568 = vst [vmem:[%s255 + $0xc] sm:$0xf] %v536
          %569 = vst [vmem:[%s255 + $0x10] sm:$0xf] %v537
          %570 = vst [vmem:[%s255 + $0x14] sm:$0xf] %v538
          %571 = vst [vmem:[%s255 + $0x18] sm:$0xf] %v539
          %572 = vst [vmem:[%s255 + $0x1c] sm:$0xf] %v540
          %573 = vst [vmem:[%s255 + $0x20] sm:$0xf] %v541
          %574 = vst [vmem:[%s255 + $0x24] sm:$0xf] %v542
          %575 = vst [vmem:[%s255 + $0x28] sm:$0xf] %v543
          %576 = vst [vmem:[%s255 + $0x2c] sm:$0xf] %v544
          %577 = vst [vmem:[%s255 + $0x30] sm:$0xf] %v545
          %578 = vst [vmem:[%s255 + $0x34] sm:$0xf] %v546
          %579 = vst [vmem:[%s255 + $0x38] sm:$0xf] %v547
          %580 = vst [vmem:[%s255 + $0x3c] sm:$0xf] %v548
        $region40: #{tpu_custom_call.1} parent=27 // pred_fallthru
          _
        %s581 = sand.u32 %s130, 1
        %s582 = scalar_lea.sflag [#allocation7], %s581
        %s583 = sand.u32 %s130, 1
        %s584 = smul.addr %s583, 64
        %s585 = scalar_lea.vmem [#allocation10], %s584
        // Predicated region
        $region41: #{tpu_custom_call.1} parent=27 // pred_check
          %p586 = pneg %p140
        $region42: #{tpu_custom_call.1} parent=27 // pred_check_branch
          %588 = sbr.rel (%p586) target = $region44
        $region43: #{tpu_custom_call.1} parent=27 // pred_region
          %s589 = sld [smem:[#allocation3 + %s36]]
          %s590 = sld [smem:[#allocation4 + %s36]]
          %s591 = ssub.s32 %s590, 1
          %p592 = scmp.lt.s32.totalorder %s37, %s591
          %s593 = scalar_select %p592, %s37, %s591
          %s594 = sadd.s32 %s589, %s593
          %s595 = smul.u32 16, %s594
          %s597 = ssub.s32 1024, 1024
          %598 = vsyncadd %s582, %s597
          %s599 = smul.addr %s36, 48
          %s600 = sadd.s32 %s595, %s599
          %s601 = smul.addr %s600, 64
          %s602 = scalar_lea.hbm %s4, %s601
          %s603 = sshll.u32 %s585, 4
          %s604 = int_to_ptr.vmem [resolvable:$true] %s603
          %609 = dma.vmem_to_hbm [thread:$0]  %s604, 1024, %s602, %s582, 64, 64, 4
        $region44: #{tpu_custom_call.1} parent=27 // pred_fallthru
          _
      $region28: #{tpu_custom_call.1} parent=5 // pred_fallthru
        _
      %p610 = scmp.le.s32.totalorder 2, %s27
      // Predicated region
      $region45: #{tpu_custom_call.1} parent=5 // pred_check
        %p611 = pneg %p610
      $region46: #{tpu_custom_call.1} parent=5 // pred_check_branch
        %613 = sbr.rel (%p611) target = $region48
      $region47: #{tpu_custom_call.1} parent=5 // pred_region
        %s614 = ssub.s32 %s27, 2
        // Predicated region
        $region49: #{tpu_custom_call.1} parent=47 // pred_check
          %p615 = pneg %p146
        $region50: #{tpu_custom_call.1} parent=47 // pred_check_branch
          %617 = sbr.rel (%p615) target = $region52
        $region51: #{tpu_custom_call.1} parent=47 // pred_region
          %s618 = sand.u32 %s131, 1
          %s619 = scalar_lea.sflag [#allocation7], %s618
          %s620 = sand.u32 %s131, 1
          %s621 = smul.addr %s620, 64
          %s622 = scalar_lea.vmem [#allocation10], %s621
          %623 = dma.done %s619, 1024
        $region52: #{tpu_custom_call.1} parent=47 // pred_fallthru
          _
      $region48: #{tpu_custom_call.1} parent=5 // pred_fallthru
        _
    $region6: #{tpu_custom_call.1} parent=1 // loop_footer
      %s31 = sadd.s32 1, %s27
    $region7: #{tpu_custom_call.1} parent=1 // loop_footer_branch
      %26 = sbr.rel target = $region3
    $region8: #{tpu_custom_call.1} parent=1 // loop_exit
      _
    %624 = vsyncpa [#allocation6], 1
    %s625 = scalar_lea.sflag [#allocation6], 1
    %626 = vsyncpa %s625, 1
    %627 = vsyncpa [#allocation9], 1
    %s628 = scalar_lea.sflag [#allocation9], 1
    %629 = vsyncpa %s628, 1
    %630 = vsyncpa [#allocation7], 1
    %s631 = scalar_lea.sflag [#allocation7], 1
    %632 = vsyncpa %s631, 1

</llo_original>
